<compile_context>
chip_gen: v5e
topology: v5e:2x2
jax: 0.10.0
libtpu: 0.0.40
codegen_flags: <defaults>
</compile_context>

<pallas_src>
import functools

import jax
import jax.numpy as jnp
from jax import lax
from jax.experimental import pallas as pl
from jax.experimental.pallas import tpu as pltpu


def _sup_uniform_kernel(labels_ref, feats_ref, proto_ref,
                        loss_ref, proto_out_ref,
                        *, proto_m, temperature, base_temperature):
    bsz = feats_ref.shape[0]
    n_cls, _ = proto_out_ref.shape

    # ---- hoisted scalar / mask prep (kept off the serial EMA chain) --------
    row_ids = lax.broadcasted_iota(jnp.int32, (n_cls, 1), 0)
    onehots = []
    for j in range(bsz):
        lbl = labels_ref[j]
        # Clamp so an out-of-range label can never become an unchecked write
        # (PyTorch would raise instead; documented divergence).
        lbl = jnp.minimum(jnp.maximum(lbl, 0), n_cls - 1)
        onehots.append(row_ids == lbl)                         # (n_cls, 1) bool

    # Pre-scale features once (independent of the serial chain).
    feats_scaled = feats_ref[...].astype(jnp.float32) * (1.0 - proto_m)   # (bsz, D)

    # ---- 1) sequential momentum prototype update (mirrors the PyTorch loop,
    #         including chained updates when samples share a label). Fully
    #         unrolled, vreg-resident: no VMEM access inside the chain. ------
    protos = proto_ref[...].astype(jnp.float32)                # (n_cls, D)
    for j in range(bsz):
        cand = protos * proto_m + feats_scaled[j:j + 1, :]     # EMA candidate, all rows
        sumsq = jnp.sum(cand * cand, axis=1, keepdims=True)    # (n_cls, 1)
        # rsqrt(max(ss,1e-24)) == 1/max(norm,1e-12) up to EUP rsqrt accuracy
        # (well within the 1e-4 tolerance vs F.normalize's sqrt+divide).
        inv = lax.rsqrt(jnp.maximum(sumsq, 1e-24))
        protos = jnp.where(onehots[j], cand * inv, protos)     # replace labeled row only

    proto_out_ref[...] = protos                                # single store

    # ---- 2) logits = P @ P.T / temperature (contract feat dim on both) -----
    logits = lax.dot_general(protos, protos, (((1,), (1,)), ((), ())),
                             preferred_element_type=jnp.float32) * (1.0 / temperature)

    # ---- 3) off-diagonal exp-sum / log / mean -> scalar loss ---------------
    # Diagonal excluded with one iota compare; mask.sum(1) is the compile-time
    # constant (n_cls - 1) for labels = arange(n_cls).
    row = lax.broadcasted_iota(jnp.int32, (n_cls, n_cls), 0)
    col = lax.broadcasted_iota(jnp.int32, (n_cls, n_cls), 1)
    # TODO(synk): like the PyTorch code, exp() has no max-subtraction; safe while
    # prototypes are unit-norm and temperature >~ 0.01 (|logits| <= 1/T).
    exp_neg = jnp.where(row != col, jnp.exp(logits), 0.0)
    num = jnp.sum(exp_neg, axis=1, keepdims=True)              # (n_cls, 1)
    mean_prob_neg = jnp.log(num * (1.0 / (n_cls - 1)))         # (n_cls, 1)
    # NOTE: PyTorch's NaN filter only fires when a row's mask is all-zero,
    # impossible with labels = arange(n_cls) and n_cls >= 2.
    loss = (temperature / base_temperature) * (jnp.sum(mean_prob_neg) / n_cls)
    loss_ref[0, 0] = loss


@functools.partial(jax.jit, static_argnames=("proto_m", "temperature", "base_temperature"))
def sup_uniform_loss(features, labels, prototypes, *,
                     proto_m=0.95, temperature=0.1, base_temperature=0.1):
    n_cls, feat_dim = prototypes.shape
    lane = 128
    d_pad = ((feat_dim + lane - 1) // lane) * lane

    feats = features.astype(jnp.float32)
    protos = prototypes.astype(jnp.float32)
    if d_pad != feat_dim:
        # Zero-pad the lane dim: numerically inert for EMA, normalize and P@P.T,
        # but gives full-lane (unmasked) vector ops and a lane-dense output slab.
        feats = jnp.pad(feats, ((0, 0), (0, d_pad - feat_dim)))
        protos = jnp.pad(protos, ((0, 0), (0, d_pad - feat_dim)))

    kernel = functools.partial(_sup_uniform_kernel,
                               proto_m=proto_m,
                               temperature=temperature,
                               base_temperature=base_temperature)
    loss, new_protos = pl.pallas_call(
        kernel,
        out_shape=(jax.ShapeDtypeStruct((1, 1), jnp.float32),          # scalar loss
                   jax.ShapeDtypeStruct((n_cls, d_pad), jnp.float32)),  # updated prototypes
        in_specs=[pl.BlockSpec(memory_space=pltpu.MemorySpace.SMEM),    # labels
                  pl.BlockSpec(memory_space=pltpu.MemorySpace.VMEM),    # features
                  pl.BlockSpec(memory_space=pltpu.MemorySpace.VMEM)],   # prototypes
        out_specs=(pl.BlockSpec(memory_space=pltpu.MemorySpace.SMEM),
                   pl.BlockSpec(memory_space=pltpu.MemorySpace.VMEM)),
        input_output_aliases={2: 1},   # prototypes buffer updated in place
    )(labels.astype(jnp.int32), feats, protos)
    # TODO(synk): at these sizes wall time is dominated by launch + tiny DMAs;
    # if this sits inside a training step, consider fusing it into a larger
    # Pallas kernel or batching several steps per call.
    return loss[0, 0], new_protos[:, :feat_dim]


def _reference(features, labels, prototypes, proto_m=0.95,
               temperature=0.1, base_temperature=0.1):
    """Plain-JAX reference mirroring the PyTorch forward."""
    def body(j, protos):
        lbl = labels[j]
        p = protos[lbl] * proto_m + features[j] * (1.0 - proto_m)
        p = p / jnp.maximum(jnp.linalg.norm(p), 1e-12)
        return protos.at[lbl].set(p)

    protos = lax.fori_loop(0, features.shape[0], body, prototypes)
    n = protos.shape[0]
    logits = (protos @ protos.T) / temperature
    mask = 1.0 - jnp.eye(n, dtype=jnp.float32)
    mpn = jnp.log((mask * jnp.exp(logits)).sum(1) / mask.sum(1))
    return (temperature / base_temperature) * mpn.mean(), protos


if __name__ == "__main__":
    # Synthetic, deterministic setup (no checkpoint / dataloader):
    #   args.n_cls = 10, args.feat_dim = 32, args.proto_m = 0.95, batch = 8.
    n_cls, feat_dim, bsz = 10, 32, 8
    key = jax.random.PRNGKey(0)
    k1, k2, k3 = jax.random.split(key, 3)

    # Stand-in for init_class_prototypes(): row-normalized prototype matrix.
    prototypes = jax.random.normal(k1, (n_cls, feat_dim), jnp.float32)
    prototypes = prototypes / jnp.linalg.norm(prototypes, axis=1, keepdims=True)

    # features: [bsz, feat_dim] normalized head outputs; labels: [bsz].
    features = jax.random.normal(k2, (bsz, feat_dim), jnp.float32)
    features = features / jnp.linalg.norm(features, axis=1, keepdims=True)
    labels = jax.random.randint(k3, (bsz,), 0, n_cls, jnp.int32)

    loss, new_protos = sup_uniform_loss(features, labels, prototypes,
                                        proto_m=0.95, temperature=0.1,
                                        base_temperature=0.1)
    jax.block_until_ready((loss, new_protos))

    ref_loss, ref_protos = _reference(features, labels, prototypes)
    assert jnp.allclose(loss, ref_loss, rtol=1e-4, atol=1e-5), (loss, ref_loss)
    assert jnp.allclose(new_protos, ref_protos, rtol=1e-4, atol=1e-5)

    print("KERNEL_OK")
</pallas_src>

<mosaic_0001>
module attributes {stable_mosaic.version = 11 : i64} {
  func.func @_sup_uniform_kernel(%arg0: memref<8xi32, #tpu.memory_space<smem>>, %arg1: memref<8x128xf32, #tpu.memory_space<vmem>>, %arg2: memref<10x128xf32, #tpu.memory_space<vmem>>, %arg3: memref<1x1xf32, #tpu.memory_space<smem>>, %arg4: memref<10x128xf32, #tpu.memory_space<vmem>>) attributes {dimension_semantics = [], scalar_prefetch = 0 : i64, scratch_operands = 0 : i64, tpu.core_type = #tpu.core_type<tc>} {
    %0 = tpu.iota {dimensions = array<i32: 0>} : vector<10x1xi32>
    %c0 = arith.constant 0 : index
    %1 = memref.load %arg0[%c0] : memref<8xi32, #tpu.memory_space<smem>>
    %c0_i32 = arith.constant 0 : i32
    %2 = arith.maxsi %1, %c0_i32 : i32
    %c9_i32 = arith.constant 9 : i32
    %3 = arith.minsi %2, %c9_i32 : i32
    %4 = vector.broadcast %3 : i32 to vector<10x1xi32>
    %5 = arith.cmpi eq, %0, %4 : vector<10x1xi32>
    %c1 = arith.constant 1 : index
    %6 = memref.load %arg0[%c1] : memref<8xi32, #tpu.memory_space<smem>>
    %c0_i32_0 = arith.constant 0 : i32
    %7 = arith.maxsi %6, %c0_i32_0 : i32
    %c9_i32_1 = arith.constant 9 : i32
    %8 = arith.minsi %7, %c9_i32_1 : i32
    %9 = vector.broadcast %8 : i32 to vector<10x1xi32>
    %10 = arith.cmpi eq, %0, %9 : vector<10x1xi32>
    %c2 = arith.constant 2 : index
    %11 = memref.load %arg0[%c2] : memref<8xi32, #tpu.memory_space<smem>>
    %c0_i32_2 = arith.constant 0 : i32
    %12 = arith.maxsi %11, %c0_i32_2 : i32
    %c9_i32_3 = arith.constant 9 : i32
    %13 = arith.minsi %12, %c9_i32_3 : i32
    %14 = vector.broadcast %13 : i32 to vector<10x1xi32>
    %15 = arith.cmpi eq, %0, %14 : vector<10x1xi32>
    %c3 = arith.constant 3 : index
    %16 = memref.load %arg0[%c3] : memref<8xi32, #tpu.memory_space<smem>>
    %c0_i32_4 = arith.constant 0 : i32
    %17 = arith.maxsi %16, %c0_i32_4 : i32
    %c9_i32_5 = arith.constant 9 : i32
    %18 = arith.minsi %17, %c9_i32_5 : i32
    %19 = vector.broadcast %18 : i32 to vector<10x1xi32>
    %20 = arith.cmpi eq, %0, %19 : vector<10x1xi32>
    %c4 = arith.constant 4 : index
    %21 = memref.load %arg0[%c4] : memref<8xi32, #tpu.memory_space<smem>>
    %c0_i32_6 = arith.constant 0 : i32
    %22 = arith.maxsi %21, %c0_i32_6 : i32
    %c9_i32_7 = arith.constant 9 : i32
    %23 = arith.minsi %22, %c9_i32_7 : i32
    %24 = vector.broadcast %23 : i32 to vector<10x1xi32>
    %25 = arith.cmpi eq, %0, %24 : vector<10x1xi32>
    %c5 = arith.constant 5 : index
    %26 = memref.load %arg0[%c5] : memref<8xi32, #tpu.memory_space<smem>>
    %c0_i32_8 = arith.constant 0 : i32
    %27 = arith.maxsi %26, %c0_i32_8 : i32
    %c9_i32_9 = arith.constant 9 : i32
    %28 = arith.minsi %27, %c9_i32_9 : i32
    %29 = vector.broadcast %28 : i32 to vector<10x1xi32>
    %30 = arith.cmpi eq, %0, %29 : vector<10x1xi32>
    %c6 = arith.constant 6 : index
    %31 = memref.load %arg0[%c6] : memref<8xi32, #tpu.memory_space<smem>>
    %c0_i32_10 = arith.constant 0 : i32
    %32 = arith.maxsi %31, %c0_i32_10 : i32
    %c9_i32_11 = arith.constant 9 : i32
    %33 = arith.minsi %32, %c9_i32_11 : i32
    %34 = vector.broadcast %33 : i32 to vector<10x1xi32>
    %35 = arith.cmpi eq, %0, %34 : vector<10x1xi32>
    %c7 = arith.constant 7 : index
    %36 = memref.load %arg0[%c7] : memref<8xi32, #tpu.memory_space<smem>>
    %c0_i32_12 = arith.constant 0 : i32
    %37 = arith.maxsi %36, %c0_i32_12 : i32
    %c9_i32_13 = arith.constant 9 : i32
    %38 = arith.minsi %37, %c9_i32_13 : i32
    %39 = vector.broadcast %38 : i32 to vector<10x1xi32>
    %40 = arith.cmpi eq, %0, %39 : vector<10x1xi32>
    %c0_14 = arith.constant 0 : index
    %c0_15 = arith.constant 0 : index
    %41 = vector.load %arg1[%c0_14, %c0_15] : memref<8x128xf32, #tpu.memory_space<vmem>>, vector<8x128xf32>
    %cst = arith.constant 5.000000e-02 : f32
    %42 = vector.broadcast %cst : f32 to vector<8x128xf32>
    %43 = arith.mulf %41, %42 : vector<8x128xf32>
    %c0_16 = arith.constant 0 : index
    %c0_17 = arith.constant 0 : index
    %44 = vector.load %arg2[%c0_16, %c0_17] : memref<10x128xf32, #tpu.memory_space<vmem>>, vector<10x128xf32>
    %cst_18 = arith.constant 0.949999988 : f32
    %45 = vector.broadcast %cst_18 : f32 to vector<10x128xf32>
    %46 = arith.mulf %44, %45 : vector<10x128xf32>
    %47 = vector.extract_strided_slice %43 {offsets = [0, 0], sizes = [1, 128], strides = [1, 1]} : vector<8x128xf32> to vector<1x128xf32>
    %48 = vector.broadcast %47 : vector<1x128xf32> to vector<10x128xf32>
    %49 = arith.addf %46, %48 : vector<10x128xf32>
    %50 = arith.mulf %49, %49 : vector<10x128xf32>
    %cst_19 = arith.constant dense<0.000000e+00> : vector<10xf32>
    %51 = vector.multi_reduction <add>, %50, %cst_19 [1] : vector<10x128xf32> to vector<10xf32>
    %52 = vector.shape_cast %51 : vector<10xf32> to vector<10x1xf32>
    %cst_20 = arith.constant 1.000000e-24 : f32
    %53 = vector.broadcast %cst_20 : f32 to vector<10x1xf32>
    %54 = arith.maximumf %52, %53 : vector<10x1xf32>
    %55 = math.rsqrt %54 : vector<10x1xf32>
    %56 = vector.broadcast %55 : vector<10x1xf32> to vector<10x128xf32>
    %57 = arith.mulf %49, %56 : vector<10x128xf32>
    %58 = vector.shape_cast %5 : vector<10x1xi1> to vector<10x1xi1>
    %59 = vector.broadcast %58 : vector<10x1xi1> to vector<10x128xi1>
    %60 = arith.select %59, %57, %44 : vector<10x128xi1>, vector<10x128xf32>
    %cst_21 = arith.constant 0.949999988 : f32
    %61 = vector.broadcast %cst_21 : f32 to vector<10x128xf32>
    %62 = arith.mulf %60, %61 : vector<10x128xf32>
    %63 = vector.extract_strided_slice %43 {offsets = [1, 0], sizes = [1, 128], strides = [1, 1]} : vector<8x128xf32> to vector<1x128xf32>
    %64 = vector.broadcast %63 : vector<1x128xf32> to vector<10x128xf32>
    %65 = arith.addf %62, %64 : vector<10x128xf32>
    %66 = arith.mulf %65, %65 : vector<10x128xf32>
    %cst_22 = arith.constant dense<0.000000e+00> : vector<10xf32>
    %67 = vector.multi_reduction <add>, %66, %cst_22 [1] : vector<10x128xf32> to vector<10xf32>
    %68 = vector.shape_cast %67 : vector<10xf32> to vector<10x1xf32>
    %cst_23 = arith.constant 1.000000e-24 : f32
    %69 = vector.broadcast %cst_23 : f32 to vector<10x1xf32>
    %70 = arith.maximumf %68, %69 : vector<10x1xf32>
    %71 = math.rsqrt %70 : vector<10x1xf32>
    %72 = vector.broadcast %71 : vector<10x1xf32> to vector<10x128xf32>
    %73 = arith.mulf %65, %72 : vector<10x128xf32>
    %74 = vector.shape_cast %10 : vector<10x1xi1> to vector<10x1xi1>
    %75 = vector.broadcast %74 : vector<10x1xi1> to vector<10x128xi1>
    %76 = arith.select %75, %73, %60 : vector<10x128xi1>, vector<10x128xf32>
    %cst_24 = arith.constant 0.949999988 : f32
    %77 = vector.broadcast %cst_24 : f32 to vector<10x128xf32>
    %78 = arith.mulf %76, %77 : vector<10x128xf32>
    %79 = vector.extract_strided_slice %43 {offsets = [2, 0], sizes = [1, 128], strides = [1, 1]} : vector<8x128xf32> to vector<1x128xf32>
    %80 = vector.broadcast %79 : vector<1x128xf32> to vector<10x128xf32>
    %81 = arith.addf %78, %80 : vector<10x128xf32>
    %82 = arith.mulf %81, %81 : vector<10x128xf32>
    %cst_25 = arith.constant dense<0.000000e+00> : vector<10xf32>
    %83 = vector.multi_reduction <add>, %82, %cst_25 [1] : vector<10x128xf32> to vector<10xf32>
    %84 = vector.shape_cast %83 : vector<10xf32> to vector<10x1xf32>
    %cst_26 = arith.constant 1.000000e-24 : f32
    %85 = vector.broadcast %cst_26 : f32 to vector<10x1xf32>
    %86 = arith.maximumf %84, %85 : vector<10x1xf32>
    %87 = math.rsqrt %86 : vector<10x1xf32>
    %88 = vector.broadcast %87 : vector<10x1xf32> to vector<10x128xf32>
    %89 = arith.mulf %81, %88 : vector<10x128xf32>
    %90 = vector.shape_cast %15 : vector<10x1xi1> to vector<10x1xi1>
    %91 = vector.broadcast %90 : vector<10x1xi1> to vector<10x128xi1>
    %92 = arith.select %91, %89, %76 : vector<10x128xi1>, vector<10x128xf32>
    %cst_27 = arith.constant 0.949999988 : f32
    %93 = vector.broadcast %cst_27 : f32 to vector<10x128xf32>
    %94 = arith.mulf %92, %93 : vector<10x128xf32>
    %95 = vector.extract_strided_slice %43 {offsets = [3, 0], sizes = [1, 128], strides = [1, 1]} : vector<8x128xf32> to vector<1x128xf32>
    %96 = vector.broadcast %95 : vector<1x128xf32> to vector<10x128xf32>
    %97 = arith.addf %94, %96 : vector<10x128xf32>
    %98 = arith.mulf %97, %97 : vector<10x128xf32>
    %cst_28 = arith.constant dense<0.000000e+00> : vector<10xf32>
    %99 = vector.multi_reduction <add>, %98, %cst_28 [1] : vector<10x128xf32> to vector<10xf32>
    %100 = vector.shape_cast %99 : vector<10xf32> to vector<10x1xf32>
    %cst_29 = arith.constant 1.000000e-24 : f32
    %101 = vector.broadcast %cst_29 : f32 to vector<10x1xf32>
    %102 = arith.maximumf %100, %101 : vector<10x1xf32>
    %103 = math.rsqrt %102 : vector<10x1xf32>
    %104 = vector.broadcast %103 : vector<10x1xf32> to vector<10x128xf32>
    %105 = arith.mulf %97, %104 : vector<10x128xf32>
    %106 = vector.shape_cast %20 : vector<10x1xi1> to vector<10x1xi1>
    %107 = vector.broadcast %106 : vector<10x1xi1> to vector<10x128xi1>
    %108 = arith.select %107, %105, %92 : vector<10x128xi1>, vector<10x128xf32>
    %cst_30 = arith.constant 0.949999988 : f32
    %109 = vector.broadcast %cst_30 : f32 to vector<10x128xf32>
    %110 = arith.mulf %108, %109 : vector<10x128xf32>
    %111 = vector.extract_strided_slice %43 {offsets = [4, 0], sizes = [1, 128], strides = [1, 1]} : vector<8x128xf32> to vector<1x128xf32>
    %112 = vector.broadcast %111 : vector<1x128xf32> to vector<10x128xf32>
    %113 = arith.addf %110, %112 : vector<10x128xf32>
    %114 = arith.mulf %113, %113 : vector<10x128xf32>
    %cst_31 = arith.constant dense<0.000000e+00> : vector<10xf32>
    %115 = vector.multi_reduction <add>, %114, %cst_31 [1] : vector<10x128xf32> to vector<10xf32>
    %116 = vector.shape_cast %115 : vector<10xf32> to vector<10x1xf32>
    %cst_32 = arith.constant 1.000000e-24 : f32
    %117 = vector.broadcast %cst_32 : f32 to vector<10x1xf32>
    %118 = arith.maximumf %116, %117 : vector<10x1xf32>
    %119 = math.rsqrt %118 : vector<10x1xf32>
    %120 = vector.broadcast %119 : vector<10x1xf32> to vector<10x128xf32>
    %121 = arith.mulf %113, %120 : vector<10x128xf32>
    %122 = vector.shape_cast %25 : vector<10x1xi1> to vector<10x1xi1>
    %123 = vector.broadcast %122 : vector<10x1xi1> to vector<10x128xi1>
    %124 = arith.select %123, %121, %108 : vector<10x128xi1>, vector<10x128xf32>
    %cst_33 = arith.constant 0.949999988 : f32
    %125 = vector.broadcast %cst_33 : f32 to vector<10x128xf32>
    %126 = arith.mulf %124, %125 : vector<10x128xf32>
    %127 = vector.extract_strided_slice %43 {offsets = [5, 0], sizes = [1, 128], strides = [1, 1]} : vector<8x128xf32> to vector<1x128xf32>
    %128 = vector.broadcast %127 : vector<1x128xf32> to vector<10x128xf32>
    %129 = arith.addf %126, %128 : vector<10x128xf32>
    %130 = arith.mulf %129, %129 : vector<10x128xf32>
    %cst_34 = arith.constant dense<0.000000e+00> : vector<10xf32>
    %131 = vector.multi_reduction <add>, %130, %cst_34 [1] : vector<10x128xf32> to vector<10xf32>
    %132 = vector.shape_cast %131 : vector<10xf32> to vector<10x1xf32>
    %cst_35 = arith.constant 1.000000e-24 : f32
    %133 = vector.broadcast %cst_35 : f32 to vector<10x1xf32>
    %134 = arith.maximumf %132, %133 : vector<10x1xf32>
    %135 = math.rsqrt %134 : vector<10x1xf32>
    %136 = vector.broadcast %135 : vector<10x1xf32> to vector<10x128xf32>
    %137 = arith.mulf %129, %136 : vector<10x128xf32>
    %138 = vector.shape_cast %30 : vector<10x1xi1> to vector<10x1xi1>
    %139 = vector.broadcast %138 : vector<10x1xi1> to vector<10x128xi1>
    %140 = arith.select %139, %137, %124 : vector<10x128xi1>, vector<10x128xf32>
    %cst_36 = arith.constant 0.949999988 : f32
    %141 = vector.broadcast %cst_36 : f32 to vector<10x128xf32>
    %142 = arith.mulf %140, %141 : vector<10x128xf32>
    %143 = vector.extract_strided_slice %43 {offsets = [6, 0], sizes = [1, 128], strides = [1, 1]} : vector<8x128xf32> to vector<1x128xf32>
    %144 = vector.broadcast %143 : vector<1x128xf32> to vector<10x128xf32>
    %145 = arith.addf %142, %144 : vector<10x128xf32>
    %146 = arith.mulf %145, %145 : vector<10x128xf32>
    %cst_37 = arith.constant dense<0.000000e+00> : vector<10xf32>
    %147 = vector.multi_reduction <add>, %146, %cst_37 [1] : vector<10x128xf32> to vector<10xf32>
    %148 = vector.shape_cast %147 : vector<10xf32> to vector<10x1xf32>
    %cst_38 = arith.constant 1.000000e-24 : f32
    %149 = vector.broadcast %cst_38 : f32 to vector<10x1xf32>
    %150 = arith.maximumf %148, %149 : vector<10x1xf32>
    %151 = math.rsqrt %150 : vector<10x1xf32>
    %152 = vector.broadcast %151 : vector<10x1xf32> to vector<10x128xf32>
    %153 = arith.mulf %145, %152 : vector<10x128xf32>
    %154 = vector.shape_cast %35 : vector<10x1xi1> to vector<10x1xi1>
    %155 = vector.broadcast %154 : vector<10x1xi1> to vector<10x128xi1>
    %156 = arith.select %155, %153, %140 : vector<10x128xi1>, vector<10x128xf32>
    %cst_39 = arith.constant 0.949999988 : f32
    %157 = vector.broadcast %cst_39 : f32 to vector<10x128xf32>
    %158 = arith.mulf %156, %157 : vector<10x128xf32>
    %159 = vector.extract_strided_slice %43 {offsets = [7, 0], sizes = [1, 128], strides = [1, 1]} : vector<8x128xf32> to vector<1x128xf32>
    %160 = vector.broadcast %159 : vector<1x128xf32> to vector<10x128xf32>
    %161 = arith.addf %158, %160 : vector<10x128xf32>
    %162 = arith.mulf %161, %161 : vector<10x128xf32>
    %cst_40 = arith.constant dense<0.000000e+00> : vector<10xf32>
    %163 = vector.multi_reduction <add>, %162, %cst_40 [1] : vector<10x128xf32> to vector<10xf32>
    %164 = vector.shape_cast %163 : vector<10xf32> to vector<10x1xf32>
    %cst_41 = arith.constant 1.000000e-24 : f32
    %165 = vector.broadcast %cst_41 : f32 to vector<10x1xf32>
    %166 = arith.maximumf %164, %165 : vector<10x1xf32>
    %167 = math.rsqrt %166 : vector<10x1xf32>
    %168 = vector.broadcast %167 : vector<10x1xf32> to vector<10x128xf32>
    %169 = arith.mulf %161, %168 : vector<10x128xf32>
    %170 = vector.shape_cast %40 : vector<10x1xi1> to vector<10x1xi1>
    %171 = vector.broadcast %170 : vector<10x1xi1> to vector<10x128xi1>
    %172 = arith.select %171, %169, %156 : vector<10x128xi1>, vector<10x128xf32>
    %c0_42 = arith.constant 0 : index
    %c0_43 = arith.constant 0 : index
    %173 = vector.load %arg4[%c0_42, %c0_43] : memref<10x128xf32, #tpu.memory_space<vmem>>, vector<10x128xf32>
    tpu.vector_store %arg4[%c0_42, %c0_43], %172 {strides = array<i32>} : memref<10x128xf32, #tpu.memory_space<vmem>>, vector<10x128xf32>,
    %cst_44 = arith.constant dense<0.000000e+00> : vector<10x10xf32>
    %174 = tpu.matmul %172, %172, %cst_44 {dimension_numbers = #tpu.dot_dimension_numbers<[1], [1], [0], [0], [0, 0, 1, 0], [], []>} : vector<10x128xf32>, vector<10x128xf32>, vector<10x10xf32> -> vector<10x10xf32>
    %cst_45 = arith.constant 1.000000e+01 : f32
    %175 = vector.broadcast %cst_45 : f32 to vector<10x10xf32>
    %176 = arith.mulf %174, %175 : vector<10x10xf32>
    %177 = tpu.iota {dimensions = array<i32: 0>} : vector<10x10xi32>
    %178 = tpu.iota {dimensions = array<i32: 1>} : vector<10x10xi32>
    %179 = arith.cmpi ne, %177, %178 : vector<10x10xi32>
    %180 = math.exp %176 : vector<10x10xf32>
    %cst_46 = arith.constant 0.000000e+00 : f32
    %181 = vector.broadcast %cst_46 : f32 to vector<10x10xf32>
    %182 = arith.select %179, %180, %181 : vector<10x10xi1>, vector<10x10xf32>
    %cst_47 = arith.constant dense<0.000000e+00> : vector<10xf32>
    %183 = vector.multi_reduction <add>, %182, %cst_47 [1] : vector<10x10xf32> to vector<10xf32>
    %184 = vector.shape_cast %183 : vector<10xf32> to vector<10x1xf32>
    %cst_48 = arith.constant 0.111111112 : f32
    %185 = vector.broadcast %cst_48 : f32 to vector<10x1xf32>
    %186 = arith.mulf %184, %185 : vector<10x1xf32>
    %187 = math.log %186 : vector<10x1xf32>
    %188 = vector.shape_cast %187 : vector<10x1xf32> to vector<1x10x1xf32>
    %cst_49 = arith.constant dense<0.000000e+00> : vector<1xf32>
    %189 = vector.multi_reduction <add>, %188, %cst_49 [1, 2] : vector<1x10x1xf32> to vector<1xf32>
    %190 = vector.shape_cast %189 : vector<1xf32> to vector<1x1x1xf32>
    %191 = vector.extract %190[0, 0, 0] : f32 from vector<1x1x1xf32>
    %cst_50 = arith.constant 1.000000e+01 : f32
    %192 = arith.divf %191, %cst_50 : f32
    %cst_51 = arith.constant 1.000000e+00 : f32
    %193 = arith.mulf %cst_51, %192 : f32
    %c0_52 = arith.constant 0 : index
    %c0_53 = arith.constant 0 : index
    %194 = memref.load %arg3[%c0_52, %c0_53] : memref<1x1xf32, #tpu.memory_space<smem>>
    memref.store %193, %arg3[%c0_52, %c0_53] : memref<1x1xf32, #tpu.memory_space<smem>>
    return
  }
}

</mosaic_0001>

<llo_original>
// kernel: sup_uniform_loss.1
$region0: #{sup_uniform_loss.1}
  #allocation0 [shape = 'u32[]', space=smem, size = 0x4, offset = 0x4, fixed_abs, tag = 'smem constant byte address 0x4 - core index']
  #allocation1 [shape = 'u32[72,128]{1,0:T(1,128)}', space=vmem, size = 0x9000, scoped, tag = 'internal scratch']
  %s0 = inlined_call_operand.vmem [shape: s32[8], index: 0, kind: input, shape index: {}]
  %s1 = inlined_call_operand.vmem [shape: f32[8,128], index: 1, kind: input, shape index: {}]
  %s2 = inlined_call_operand.vmem [shape: f32[10,128], index: 2, kind: input, shape index: {}, may-alias: {2,4}]
  %s3 = inlined_call_operand.hbm [shape: f32[1,1], index: 3, kind: output, shape index: {0}]
  %s4 = inlined_call_operand.vmem [shape: f32[10,128], index: 4, kind: output, shape index: {1}, may-alias: {2,4}]
  %5 = xla_tuple %s3, %s4
  %s6 = sld [smem:[#allocation0]]
  $region34: #{sup_uniform_loss.1} parent=0
    _
  %s8 = ssub.s32 1, %s6
  %s9 = scalar_select 0, %s8, %s6
  $region1: #{sup_uniform_loss.1} parent=0
    #allocation2 [shape = 'u8[512]{0}', space=smem, size = 0x200, scoped, tag = 'input window, operand 0, single buffered']
    #allocation3 [shape = 's32[1]{0}', space=sflag, size = 0x4, scoped, tag = 'scoped memory for sup_uniform_loss.1']
    #allocation4 [shape = 's32[1]{0}', space=sflag, size = 0x4, scoped, tag = 'scoped memory for sup_uniform_loss.1']
    #allocation5 [shape = 'u8[512]{0}', space=smem, size = 0x200, scoped, tag = 'output window, operand 0, single buffered']
    %10 = vsyncpa [#allocation4], 0
    %11 = vsyncpa [#allocation3], 0
    // Predicated region
    $region2: #{sup_uniform_loss.1} parent=1 // pred_check
      _
    $region3: #{sup_uniform_loss.1} parent=1 // pred_check_branch
      %13 = sbr.rel (0) target = $region5
    $region4: #{sup_uniform_loss.1} parent=1 // pred_region
      %15 = vsyncadd [#allocation4], 0
      %s17 = sshll.u32 %s0, 4
      %s18 = int_to_ptr.vmem [resolvable:$true] %s17
      %20 = dma.vmem_to_smem %s18, 16, [#allocation2], [#allocation4]
    $region5: #{sup_uniform_loss.1} parent=1 // pred_fallthru
      _
    // Predicated region
    $region6: #{sup_uniform_loss.1} parent=1 // pred_check
      _
    $region7: #{sup_uniform_loss.1} parent=1 // pred_check_branch
      %22 = sbr.rel (0) target = $region9
    $region8: #{sup_uniform_loss.1} parent=1 // pred_region
      _
    $region9: #{sup_uniform_loss.1} parent=1 // pred_fallthru
      _
    // Predicated region
    $region10: #{sup_uniform_loss.1} parent=1 // pred_check
      _
    $region11: #{sup_uniform_loss.1} parent=1 // pred_check_branch
      %24 = sbr.rel (0) target = $region13
    $region12: #{sup_uniform_loss.1} parent=1 // pred_region
      _
    $region13: #{sup_uniform_loss.1} parent=1 // pred_fallthru
      _
    // Predicated region
    $region14: #{sup_uniform_loss.1} parent=1 // pred_check
      _
    $region15: #{sup_uniform_loss.1} parent=1 // pred_check_branch
      %26 = sbr.rel (0) target = $region17
    $region16: #{sup_uniform_loss.1} parent=1 // pred_region
      %28 = dma.done [#allocation4], 16
    $region17: #{sup_uniform_loss.1} parent=1 // pred_fallthru
      _
    %29 = sfence
    %v30 = vlaneseq
    %v31 = vshrl.u32 %v30, 7
    %v32 = vadd.s32 %v31, 8
    %s33 = sld [smem:[#allocation2]]
    %p34 = scmp.gt.s32.totalorder %s33, 0
    %s35 = scalar_select %p34, %s33, 0
    %p36 = scmp.lt.s32.totalorder %s35, 9
    %s37 = scalar_select %p36, %s35, 9
    %v38 = vstv %s37
    %vm39 = vcmp.eq.s32.totalorder %v31, %v38
    %vm40 = vcmp.eq.s32.totalorder %v32, %v38
    %s41 = sld [smem:[#allocation2 + $0x1]]
    %p42 = scmp.gt.s32.totalorder %s41, 0
    %s43 = scalar_select %p42, %s41, 0
    %p44 = scmp.lt.s32.totalorder %s43, 9
    %s45 = scalar_select %p44, %s43, 9
    %v46 = vstv %s45
    %vm47 = vcmp.eq.s32.totalorder %v31, %v46
    %vm48 = vcmp.eq.s32.totalorder %v32, %v46
    %s49 = sld [smem:[#allocation2 + $0x2]]
    %p50 = scmp.gt.s32.totalorder %s49, 0
    %s51 = scalar_select %p50, %s49, 0
    %p52 = scmp.lt.s32.totalorder %s51, 9
    %s53 = scalar_select %p52, %s51, 9
    %v54 = vstv %s53
    %vm55 = vcmp.eq.s32.totalorder %v31, %v54
    %vm56 = vcmp.eq.s32.totalorder %v32, %v54
    %s57 = sld [smem:[#allocation2 + $0x3]]
    %p58 = scmp.gt.s32.totalorder %s57, 0
    %s59 = scalar_select %p58, %s57, 0
    %p60 = scmp.lt.s32.totalorder %s59, 9
    %s61 = scalar_select %p60, %s59, 9
    %v62 = vstv %s61
    %vm63 = vcmp.eq.s32.totalorder %v31, %v62
    %vm64 = vcmp.eq.s32.totalorder %v32, %v62
    %s65 = sld [smem:[#allocation2 + $0x4]]
    %p66 = scmp.gt.s32.totalorder %s65, 0
    %s67 = scalar_select %p66, %s65, 0
    %p68 = scmp.lt.s32.totalorder %s67, 9
    %s69 = scalar_select %p68, %s67, 9
    %v70 = vstv %s69
    %vm71 = vcmp.eq.s32.totalorder %v31, %v70
    %vm72 = vcmp.eq.s32.totalorder %v32, %v70
    %s73 = sld [smem:[#allocation2 + $0x5]]
    %p74 = scmp.gt.s32.totalorder %s73, 0
    %s75 = scalar_select %p74, %s73, 0
    %p76 = scmp.lt.s32.totalorder %s75, 9
    %s77 = scalar_select %p76, %s75, 9
    %v78 = vstv %s77
    %vm79 = vcmp.eq.s32.totalorder %v31, %v78
    %vm80 = vcmp.eq.s32.totalorder %v32, %v78
    %s81 = sld [smem:[#allocation2 + $0x6]]
    %p82 = scmp.gt.s32.totalorder %s81, 0
    %s83 = scalar_select %p82, %s81, 0
    %p84 = scmp.lt.s32.totalorder %s83, 9
    %s85 = scalar_select %p84, %s83, 9
    %v86 = vstv %s85
    %vm87 = vcmp.eq.s32.totalorder %v31, %v86
    %vm88 = vcmp.eq.s32.totalorder %v32, %v86
    %s89 = sld [smem:[#allocation2 + $0x7]]
    %p90 = scmp.gt.s32.totalorder %s89, 0
    %s91 = scalar_select %p90, %s89, 0
    %p92 = scmp.lt.s32.totalorder %s91, 9
    %s93 = scalar_select %p92, %s91, 9
    %v94 = vstv %s93
    %vm95 = vcmp.eq.s32.totalorder %v31, %v94
    %vm96 = vcmp.eq.s32.totalorder %v32, %v94
    %v97 = vld [vmem:[%s1] sm:$0xff]
    %v98 = vmul.f32 %v97, 0.05
    %v99 = vld [vmem:[%s2] sm:$0xff]
    %v100 = vld [vmem:[%s2 + $0x8] sm:$0x3]
    %v101 = vmul.f32 %v99, 0.95
    %v102 = vmul.f32 %v100, 0.95
    %v103 = vperm.slane %v98, 0
    %v104 = vadd.f32 %v101, %v103
    %v105 = vadd.f32 %v102, %v103
    %v106 = vmul.f32 %v104, %v104
    %v107 = vmul.f32 %v105, %v105
    %108 = vadd.xlane.f32.xlu0 %v106
    %v109 = vpop.xlane.xlu0 %108
    %vm110 = vcmask 1041408
    %v111 = vsel %vm110, %v107, 0.0
    %112 = vadd.xlane.f32.xlu0 %v111
    %v113 = vpop.xlane.xlu0 %112
    %v114 = vmax.f32 %v109, 1e-24
    %v115 = vmax.f32 %v113, 1e-24
    %v116 = vrsqrt.pop %v114
    %v117 = vmul.f32 %v116, %v114
    %v118 = vmul.f32 %v117, %v116
    %v119 = vmul.f32 0.5, %v118
    %v120 = vsub.f32 1.5, %v119
    %v121 = vmul.f32 %v116, %v120
    %vm122 = vweird.f32 %v114
    %vm123 = vweird.f32 %v116
    %vm124 = vmor %vm122, %vm123
    %v125 = vsel %vm124, %v116, %v121
    %v126 = vrsqrt.pop %v115
    %v127 = vmul.f32 %v126, %v115
    %v128 = vmul.f32 %v127, %v126
    %v129 = vmul.f32 0.5, %v128
    %v130 = vsub.f32 1.5, %v129
    %v131 = vmul.f32 %v126, %v130
    %vm132 = vweird.f32 %v115
    %vm133 = vweird.f32 %v126
    %vm134 = vmor %vm132, %vm133
    %v135 = vsel %vm134, %v126, %v131
    %v136 = vmul.f32 %v104, %v125
    %v137 = vmul.f32 %v105, %v135
    %v138 = vsel %vm39, 1, 0
    %v139 = vsel %vm40, 1, 0
    %vm140 = vcmp.eq.s32.totalorder %v138, 1
    %vm141 = vcmp.eq.s32.totalorder %v139, 1
    %v142 = vsel %vm140, %v136, %v99
    %v143 = vsel %vm141, %v137, %v100
    %v144 = vmul.f32 %v142, 0.95
    %v145 = vmul.f32 %v143, 0.95
    %v146 = vperm.slane %v98, 1
    %v147 = vadd.f32 %v144, %v146
    %v148 = vadd.f32 %v145, %v146
    %v149 = vmul.f32 %v147, %v147
    %v150 = vmul.f32 %v148, %v148
    %151 = vadd.xlane.f32.xlu0 %v149
    %v152 = vpop.xlane.xlu0 %151
    %v153 = vsel %vm110, %v150, 0.0
    %154 = vadd.xlane.f32.xlu0 %v153
    %v155 = vpop.xlane.xlu0 %154
    %v156 = vmax.f32 %v152, 1e-24
    %v157 = vmax.f32 %v155, 1e-24
    %v158 = vrsqrt.pop %v156
    %v159 = vmul.f32 %v158, %v156
    %v160 = vmul.f32 %v159, %v158
    %v161 = vmul.f32 0.5, %v160
    %v162 = vsub.f32 1.5, %v161
    %v163 = vmul.f32 %v158, %v162
    %vm164 = vweird.f32 %v156
    %vm165 = vweird.f32 %v158
    %vm166 = vmor %vm164, %vm165
    %v167 = vsel %vm166, %v158, %v163
    %v168 = vrsqrt.pop %v157
    %v169 = vmul.f32 %v168, %v157
    %v170 = vmul.f32 %v169, %v168
    %v171 = vmul.f32 0.5, %v170
    %v172 = vsub.f32 1.5, %v171
    %v173 = vmul.f32 %v168, %v172
    %vm174 = vweird.f32 %v157
    %vm175 = vweird.f32 %v168
    %vm176 = vmor %vm174, %vm175
    %v177 = vsel %vm176, %v168, %v173
    %v178 = vmul.f32 %v147, %v167
    %v179 = vmul.f32 %v148, %v177
    %v180 = vsel %vm47, 1, 0
    %v181 = vsel %vm48, 1, 0
    %vm182 = vcmp.eq.s32.totalorder %v180, 1
    %vm183 = vcmp.eq.s32.totalorder %v181, 1
    %v184 = vsel %vm182, %v178, %v142
    %v185 = vsel %vm183, %v179, %v143
    %v186 = vmul.f32 %v184, 0.95
    %v187 = vmul.f32 %v185, 0.95
    %v188 = vperm.slane %v98, 2
    %v189 = vadd.f32 %v186, %v188
    %v190 = vadd.f32 %v187, %v188
    %v191 = vmul.f32 %v189, %v189
    %v192 = vmul.f32 %v190, %v190
    %193 = vadd.xlane.f32.xlu0 %v191
    %v194 = vpop.xlane.xlu0 %193
    %v195 = vsel %vm110, %v192, 0.0
    %196 = vadd.xlane.f32.xlu0 %v195
    %v197 = vpop.xlane.xlu0 %196
    %v198 = vmax.f32 %v194, 1e-24
    %v199 = vmax.f32 %v197, 1e-24
    %v200 = vrsqrt.pop %v198
    %v201 = vmul.f32 %v200, %v198
    %v202 = vmul.f32 %v201, %v200
    %v203 = vmul.f32 0.5, %v202
    %v204 = vsub.f32 1.5, %v203
    %v205 = vmul.f32 %v200, %v204
    %vm206 = vweird.f32 %v198
    %vm207 = vweird.f32 %v200
    %vm208 = vmor %vm206, %vm207
    %v209 = vsel %vm208, %v200, %v205
    %v210 = vrsqrt.pop %v199
    %v211 = vmul.f32 %v210, %v199
    %v212 = vmul.f32 %v211, %v210
    %v213 = vmul.f32 0.5, %v212
    %v214 = vsub.f32 1.5, %v213
    %v215 = vmul.f32 %v210, %v214
    %vm216 = vweird.f32 %v199
    %vm217 = vweird.f32 %v210
    %vm218 = vmor %vm216, %vm217
    %v219 = vsel %vm218, %v210, %v215
    %v220 = vmul.f32 %v189, %v209
    %v221 = vmul.f32 %v190, %v219
    %v222 = vsel %vm55, 1, 0
    %v223 = vsel %vm56, 1, 0
    %vm224 = vcmp.eq.s32.totalorder %v222, 1
    %vm225 = vcmp.eq.s32.totalorder %v223, 1
    %v226 = vsel %vm224, %v220, %v184
    %v227 = vsel %vm225, %v221, %v185
    %v228 = vmul.f32 %v226, 0.95
    %v229 = vmul.f32 %v227, 0.95
    %v230 = vperm.slane %v98, 3
    %v231 = vadd.f32 %v228, %v230
    %v232 = vadd.f32 %v229, %v230
    %v233 = vmul.f32 %v231, %v231
    %v234 = vmul.f32 %v232, %v232
    %235 = vadd.xlane.f32.xlu0 %v233
    %v236 = vpop.xlane.xlu0 %235
    %v237 = vsel %vm110, %v234, 0.0
    %238 = vadd.xlane.f32.xlu0 %v237
    %v239 = vpop.xlane.xlu0 %238
    %v240 = vmax.f32 %v236, 1e-24
    %v241 = vmax.f32 %v239, 1e-24
    %v242 = vrsqrt.pop %v240
    %v243 = vmul.f32 %v242, %v240
    %v244 = vmul.f32 %v243, %v242
    %v245 = vmul.f32 0.5, %v244
    %v246 = vsub.f32 1.5, %v245
    %v247 = vmul.f32 %v242, %v246
    %vm248 = vweird.f32 %v240
    %vm249 = vweird.f32 %v242
    %vm250 = vmor %vm248, %vm249
    %v251 = vsel %vm250, %v242, %v247
    %v252 = vrsqrt.pop %v241
    %v253 = vmul.f32 %v252, %v241
    %v254 = vmul.f32 %v253, %v252
    %v255 = vmul.f32 0.5, %v254
    %v256 = vsub.f32 1.5, %v255
    %v257 = vmul.f32 %v252, %v256
    %vm258 = vweird.f32 %v241
    %vm259 = vweird.f32 %v252
    %vm260 = vmor %vm258, %vm259
    %v261 = vsel %vm260, %v252, %v257
    %v262 = vmul.f32 %v231, %v251
    %v263 = vmul.f32 %v232, %v261
    %v264 = vsel %vm63, 1, 0
    %v265 = vsel %vm64, 1, 0
    %vm266 = vcmp.eq.s32.totalorder %v264, 1
    %vm267 = vcmp.eq.s32.totalorder %v265, 1
    %v268 = vsel %vm266, %v262, %v226
    %v269 = vsel %vm267, %v263, %v227
    %v270 = vmul.f32 %v268, 0.95
    %v271 = vmul.f32 %v269, 0.95
    %v272 = vperm.slane %v98, 4
    %v273 = vadd.f32 %v270, %v272
    %v274 = vadd.f32 %v271, %v272
    %v275 = vmul.f32 %v273, %v273
    %v276 = vmul.f32 %v274, %v274
    %277 = vadd.xlane.f32.xlu0 %v275
    %v278 = vpop.xlane.xlu0 %277
    %v279 = vsel %vm110, %v276, 0.0
    %280 = vadd.xlane.f32.xlu0 %v279
    %v281 = vpop.xlane.xlu0 %280
    %v282 = vmax.f32 %v278, 1e-24
    %v283 = vmax.f32 %v281, 1e-24
    %v284 = vrsqrt.pop %v282
    %v285 = vmul.f32 %v284, %v282
    %v286 = vmul.f32 %v285, %v284
    %v287 = vmul.f32 0.5, %v286
    %v288 = vsub.f32 1.5, %v287
    %v289 = vmul.f32 %v284, %v288
    %vm290 = vweird.f32 %v282
    %vm291 = vweird.f32 %v284
    %vm292 = vmor %vm290, %vm291
    %v293 = vsel %vm292, %v284, %v289
    %v294 = vrsqrt.pop %v283
    %v295 = vmul.f32 %v294, %v283
    %v296 = vmul.f32 %v295, %v294
    %v297 = vmul.f32 0.5, %v296
    %v298 = vsub.f32 1.5, %v297
    %v299 = vmul.f32 %v294, %v298
    %vm300 = vweird.f32 %v283
    %vm301 = vweird.f32 %v294
    %vm302 = vmor %vm300, %vm301
    %v303 = vsel %vm302, %v294, %v299
    %v304 = vmul.f32 %v273, %v293
    %v305 = vmul.f32 %v274, %v303
    %v306 = vsel %vm71, 1, 0
    %v307 = vsel %vm72, 1, 0
    %vm308 = vcmp.eq.s32.totalorder %v306, 1
    %vm309 = vcmp.eq.s32.totalorder %v307, 1
    %v310 = vsel %vm308, %v304, %v268
    %v311 = vsel %vm309, %v305, %v269
    %v312 = vmul.f32 %v310, 0.95
    %v313 = vmul.f32 %v311, 0.95
    %v314 = vperm.slane %v98, 5
    %v315 = vadd.f32 %v312, %v314
    %v316 = vadd.f32 %v313, %v314
    %v317 = vmul.f32 %v315, %v315
    %v318 = vmul.f32 %v316, %v316
    %319 = vadd.xlane.f32.xlu0 %v317
    %v320 = vpop.xlane.xlu0 %319
    %v321 = vsel %vm110, %v318, 0.0
    %322 = vadd.xlane.f32.xlu0 %v321
    %v323 = vpop.xlane.xlu0 %322
    %v324 = vmax.f32 %v320, 1e-24
    %v325 = vmax.f32 %v323, 1e-24
    %v326 = vrsqrt.pop %v324
    %v327 = vmul.f32 %v326, %v324
    %v328 = vmul.f32 %v327, %v326
    %v329 = vmul.f32 0.5, %v328
    %v330 = vsub.f32 1.5, %v329
    %v331 = vmul.f32 %v326, %v330
    %vm332 = vweird.f32 %v324
    %vm333 = vweird.f32 %v326
    %vm334 = vmor %vm332, %vm333
    %v335 = vsel %vm334, %v326, %v331
    %v336 = vrsqrt.pop %v325
    %v337 = vmul.f32 %v336, %v325
    %v338 = vmul.f32 %v337, %v336
    %v339 = vmul.f32 0.5, %v338
    %v340 = vsub.f32 1.5, %v339
    %v341 = vmul.f32 %v336, %v340
    %vm342 = vweird.f32 %v325
    %vm343 = vweird.f32 %v336
    %vm344 = vmor %vm342, %vm343
    %v345 = vsel %vm344, %v336, %v341
    %v346 = vmul.f32 %v315, %v335
    %v347 = vmul.f32 %v316, %v345
    %v348 = vsel %vm79, 1, 0
    %v349 = vsel %vm80, 1, 0
    %vm350 = vcmp.eq.s32.totalorder %v348, 1
    %vm351 = vcmp.eq.s32.totalorder %v349, 1
    %v352 = vsel %vm350, %v346, %v310
    %v353 = vsel %vm351, %v347, %v311
    %v354 = vmul.f32 %v352, 0.95
    %v355 = vmul.f32 %v353, 0.95
    %v356 = vperm.slane %v98, 6
    %v357 = vadd.f32 %v354, %v356
    %v358 = vadd.f32 %v355, %v356
    %v359 = vmul.f32 %v357, %v357
    %v360 = vmul.f32 %v358, %v358
    %361 = vadd.xlane.f32.xlu0 %v359
    %v362 = vpop.xlane.xlu0 %361
    %v363 = vsel %vm110, %v360, 0.0
    %364 = vadd.xlane.f32.xlu0 %v363
    %v365 = vpop.xlane.xlu0 %364
    %v366 = vmax.f32 %v362, 1e-24
    %v367 = vmax.f32 %v365, 1e-24
    %v368 = vrsqrt.pop %v366
    %v369 = vmul.f32 %v368, %v366
    %v370 = vmul.f32 %v369, %v368
    %v371 = vmul.f32 0.5, %v370
    %v372 = vsub.f32 1.5, %v371
    %v373 = vmul.f32 %v368, %v372
    %vm374 = vweird.f32 %v366
    %vm375 = vweird.f32 %v368
    %vm376 = vmor %vm374, %vm375
    %v377 = vsel %vm376, %v368, %v373
    %v378 = vrsqrt.pop %v367
    %v379 = vmul.f32 %v378, %v367
    %v380 = vmul.f32 %v379, %v378
    %v381 = vmul.f32 0.5, %v380
    %v382 = vsub.f32 1.5, %v381
    %v383 = vmul.f32 %v378, %v382
    %vm384 = vweird.f32 %v367
    %vm385 = vweird.f32 %v378
    %vm386 = vmor %vm384, %vm385
    %v387 = vsel %vm386, %v378, %v383
    %v388 = vmul.f32 %v357, %v377
    %v389 = vmul.f32 %v358, %v387
    %v390 = vsel %vm87, 1, 0
    %v391 = vsel %vm88, 1, 0
    %vm392 = vcmp.eq.s32.totalorder %v390, 1
    %vm393 = vcmp.eq.s32.totalorder %v391, 1
    %v394 = vsel %vm392, %v388, %v352
    %v395 = vsel %vm393, %v389, %v353
    %v396 = vmul.f32 %v394, 0.95
    %v397 = vmul.f32 %v395, 0.95
    %v398 = vperm.slane %v98, 7
    %v399 = vadd.f32 %v396, %v398
    %v400 = vadd.f32 %v397, %v398
    %v401 = vmul.f32 %v399, %v399
    %v402 = vmul.f32 %v400, %v400
    %403 = vadd.xlane.f32.xlu0 %v401
    %v404 = vpop.xlane.xlu0 %403
    %v405 = vsel %vm110, %v402, 0.0
    %406 = vadd.xlane.f32.xlu0 %v405
    %v407 = vpop.xlane.xlu0 %406
    %v408 = vmax.f32 %v404, 1e-24
    %v409 = vmax.f32 %v407, 1e-24
    %v410 = vrsqrt.pop %v408
    %v411 = vmul.f32 %v410, %v408
    %v412 = vmul.f32 %v411, %v410
    %v413 = vmul.f32 0.5, %v412
    %v414 = vsub.f32 1.5, %v413
    %v415 = vmul.f32 %v410, %v414
    %vm416 = vweird.f32 %v408
    %vm417 = vweird.f32 %v410
    %vm418 = vmor %vm416, %vm417
    %v419 = vsel %vm418, %v410, %v415
    %v420 = vrsqrt.pop %v409
    %v421 = vmul.f32 %v420, %v409
    %v422 = vmul.f32 %v421, %v420
    %v423 = vmul.f32 0.5, %v422
    %v424 = vsub.f32 1.5, %v423
    %v425 = vmul.f32 %v420, %v424
    %vm426 = vweird.f32 %v409
    %vm427 = vweird.f32 %v420
    %vm428 = vmor %vm426, %vm427
    %v429 = vsel %vm428, %v420, %v425
    %v430 = vmul.f32 %v399, %v419
    %v431 = vmul.f32 %v400, %v429
    %v432 = vsel %vm95, 1, 0
    %v433 = vsel %vm96, 1, 0
    %vm434 = vcmp.eq.s32.totalorder %v432, 1
    %vm435 = vcmp.eq.s32.totalorder %v433, 1
    %v436 = vsel %vm434, %v430, %v394
    %v437 = vsel %vm435, %v431, %v395
    %438 = vst [vmem:[%s4] sm:$0xff] %v436
    %439 = vst [vmem:[%s4 + $0x8] sm:$0x3] %v437
    %440 = vmatpush.xpose.msra.mxu0 0.0
    %441 = vmatpush.xpose.msra.mxu0 0.0
    %442 = vmatpush.xpose.msra.mxu0 0.0
    %443 = vmatpush.xpose.msra.mxu0 0.0
    %444 = vmatpush.xpose.msra.mxu0 0.0
    %445 = vmatpush.xpose.msra.mxu0 0.0
    %446 = vmatpush.xpose.msra.mxu0 0.0
    %447 = vmatpush.xpose.msra.mxu0 0.0
    %448 = vmatpush.xpose.msra.mxu0 0.0
    %449 = vmatpush.xpose.msra.mxu0 0.0
    %450 = vmatpush.xpose.msra.mxu0 0.0
    %451 = vmatpush.xpose.msra.mxu0 0.0
    %452 = vmatpush.xpose.msra.mxu0 0.0
    %453 = vmatpush.xpose.msra.mxu0 0.0
    %454 = vmatpush.xpose.msra.mxu0 %v437
    %455 = vmatpush.xpose.msra.mxu0 %v436
    %456 = vmatmul.f32.gmra.mxu0 %v436
    %v457 = vpop.f32.mrf.mxu0
    %v458 = vadd.f32 0.0, %v457
    %459 = vmatmul.f32.gmra.mxu0 %v437
    %v460 = vpop.f32.mrf.mxu0
    %v461 = vadd.f32 0.0, %v460
    %462 = vdwg.mxu0
    %v463 = vmul.f32 %v458, 10.0
    %v464 = vmul.f32 %v461, 10.0
    %v465 = vlaneseq
    %v466 = vand.u32 %v465, 127
    %vm467 = vcmp.ne.s32.totalorder %v31, %v466
    %vm468 = vcmp.ne.s32.totalorder %v32, %v466
    %v469 = vmul.f32 %v463, 1.442695
    %v470 = vpow.pop %v469
    %v471 = vmul.f32 %v464, 1.442695
    %v472 = vpow.pop %v471
    %v473 = vsel %vm467, %v470, 0.0
    %v474 = vsel %vm468, %v472, 0.0
    %vm475 = vcmask 80896
    %v476 = vsel %vm475, %v473, 0.0
    %477 = vadd.xlane.f32.xlu0 %v476
    %v478 = vpop.xlane.xlu0 %477
    %vm479 = vcmask 74752
    %v480 = vsel %vm479, %v474, 0.0
    %481 = vadd.xlane.f32.xlu0 %v480
    %v482 = vpop.xlane.xlu0 %481
    %v483 = vmul.f32 %v478, 0.11111111
    %v484 = vmul.f32 %v482, 0.11111111
    %v485 = vlog2.pop %v483
    %v486 = vmul.f32 %v485, 0.6931472
    %v487 = vlog2.pop %v484
    %v488 = vmul.f32 %v487, 0.6931472
    %vm489 = vcmask 7168
    %v490 = vsel %vm489, %v486, 0.0
    %vm491 = vcmask 1024
    %v492 = vsel %vm491, %v488, 0.0
    %v493 = vadd.f32 %v490, %v492
    %494 = vadd.xlane.f32.xlu0 %v493
    %v495 = vpop.xlane.xlu0 %494
    %v496 = vrot.slane %v495, 4
    %v497 = vadd.f32 %v495, %v496
    %v498 = vrot.slane %v497, 2
    %v499 = vadd.f32 %v497, %v498
    %v500 = vrot.slane %v499, 1
    %v501 = vadd.f32 %v499, %v500
    %s502 = vtos %v501
    %v503 = vrcp.pop 10.0
    %v504 = vmul.f32 10.0, %v503
    %v505 = vsub.f32 1.0, %v504
    %v506 = vmul.f32 %v503, %v505
    %v507 = vadd.f32 %v503, %v506
    %vm508 = vweird.f32 %v503
    %v509 = vsel %vm508, %v503, %v507
    %s510 = vtos %v509
    %s511 = smul.f32 %s502, %s510
    %s512 = scalar_lea.smem [#allocation5], 0
    %513 = sst [smem:[%s512]] %s511
    // Predicated region
    $region18: #{sup_uniform_loss.1} parent=1 // pred_check
      _
    $region19: #{sup_uniform_loss.1} parent=1 // pred_check_branch
      %515 = sbr.rel (0) target = $region21
    $region20: #{sup_uniform_loss.1} parent=1 // pred_region
      %517 = vsyncadd [#allocation3], 0
      %s519 = sshll.u32 %s3, 4
      %s520 = int_to_ptr.hbm [resolvable:$true] %s519
      %522 = dma.smem_to_hbm [#allocation5], 16, %s520, [#allocation3]
    $region21: #{sup_uniform_loss.1} parent=1 // pred_fallthru
      _
    // Predicated region
    $region22: #{sup_uniform_loss.1} parent=1 // pred_check
      _
    $region23: #{sup_uniform_loss.1} parent=1 // pred_check_branch
      %524 = sbr.rel (0) target = $region25
    $region24: #{sup_uniform_loss.1} parent=1 // pred_region
      _
    $region25: #{sup_uniform_loss.1} parent=1 // pred_fallthru
      _
    // Predicated region
    $region26: #{sup_uniform_loss.1} parent=1 // pred_check
      _
    $region27: #{sup_uniform_loss.1} parent=1 // pred_check_branch
      %526 = sbr.rel (0) target = $region29
    $region28: #{sup_uniform_loss.1} parent=1 // pred_region
      %528 = dma.done [#allocation3], 16
    $region29: #{sup_uniform_loss.1} parent=1 // pred_fallthru
      _
    // Predicated region
    $region30: #{sup_uniform_loss.1} parent=1 // pred_check
      _
    $region31: #{sup_uniform_loss.1} parent=1 // pred_check_branch
      %530 = sbr.rel (0) target = $region33
    $region32: #{sup_uniform_loss.1} parent=1 // pred_region
      _
    $region33: #{sup_uniform_loss.1} parent=1 // pred_fallthru
      _
    %531 = sfence
    %532 = vsyncpa [#allocation3], 1
    %533 = vsyncpa [#allocation4], 1

</llo_original>
